<compile_context>
chip_gen: v6e
topology: v6e:2x2x1
jax: 0.10.0
libtpu: 0.0.40
codegen_flags: <defaults>
</compile_context>

<pallas_src>
import jax
import jax.numpy as jnp
from jax.experimental import pallas as pl
from jax.experimental.pallas import tpu as pltpu

EMBED_SIZE = 384
_SMALL_M_MAX = 1024   # below this: single grid step (latency regime)
_MAX_TILE_M = 2048    # multiple of 256; ~30 MiB footprint, fits v7x's 64 MiB


def _round_up(n, m):
    return (n + m - 1) // m * m


def _ffn_kernel(x_ref, w1_ref, b1_ref, w2_ref, b2_ref, o_ref):
    # x_ref: [TM, E] native dtype   w1/w2: [E, E] bf16   b1/b2: [1, E] f32
    x = x_ref[...].astype(jnp.bfloat16)                               # cast in-kernel
    h = jnp.dot(x, w1_ref[...], preferred_element_type=jnp.float32)   # MXU, f32 acc
    h = jnp.maximum(h + b1_ref[...], 0.0)                             # bias + ReLU, f32 VPU
    h = h.astype(jnp.bfloat16)                                        # bf16 spill between dots
    y = jnp.dot(h, w2_ref[...], preferred_element_type=jnp.float32)   # MXU, f32 acc
    o_ref[...] = (y + b2_ref[...]).astype(o_ref.dtype)


def _choose_tile_m(M):
    if M <= _SMALL_M_MAX:
        # One grid step; multiple of 16 keeps bf16 sublane packing friendly.
        return _round_up(M, 16)
    # Throughput regime: big tiles (multiple of 256 for the 2x256 MXU rows),
    # but keep >= 4 grid steps so v7x's two TensorCores each get pipeline depth.
    tile = _round_up(pl.cdiv(M, 4), 256)
    return int(max(256, min(tile, _MAX_TILE_M)))


def _vmem_cap_bytes():
    if hasattr(pltpu, "get_tpu_info"):
        try:
            # Leave headroom below physical capacity (v5e/v6e 128 MiB, v7x 64 MiB).
            return int(pltpu.get_tpu_info().vmem_capacity_bytes) - (16 << 20)
        except Exception:
            pass
    return 48 << 20  # conservative: safe on v7x's 64 MiB physical VMEM


def _vmem_limit_bytes(tile_m, E, x_itemsize, out_itemsize, w_itemsize):
    need = (
        2 * tile_m * E * x_itemsize        # x tiles, double-buffered
        + 2 * tile_m * E * out_itemsize    # out tiles, double-buffered
        + 3 * tile_m * E * 4               # f32/bf16 intermediates inside the body
        + 2 * 2 * E * E * w_itemsize       # w1 + w2 (double-buffered, constant index)
        + 2 * 2 * 8 * E * 4                # (1,E) biases padded to 8 sublanes
    )
    return min(need + (8 << 20), _vmem_cap_bytes())


def feed_forward(x, w1, b1, w2, b2, *, tile_m=None, out_dtype=None):
    """Fused Linear -> ReLU -> Linear.

    x:  [..., E] activations (f32 or bf16), passed to the kernel in native dtype.
    w1, w2: [E, E] weights stored input-major ([in, out], i.e. PyTorch W.T).
            Pass them pre-cast to bf16 to avoid per-call casts.
    b1, b2: [E] biases.
    """
    *lead, E = x.shape
    assert E == EMBED_SIZE
    if out_dtype is None:
        out_dtype = x.dtype

    M = 1
    for d in lead:
        M *= d
    x2d = x.reshape(M, E)

    if tile_m is None:
        tile_m = _choose_tile_m(M)
    assert tile_m % 8 == 0, "tile_m must be a multiple of 8 (sublane packing)"

    grid = (pl.cdiv(M, tile_m),)  # ragged tail handled by Pallas block masking

    # bf16 weight operands for the MXU (no-op if already bf16); biases stay f32
    # for the VPU epilogue (v5e has no bf16 VALU).
    w1_c = w1 if w1.dtype == jnp.bfloat16 else w1.astype(jnp.bfloat16)
    w2_c = w2 if w2.dtype == jnp.bfloat16 else w2.astype(jnp.bfloat16)
    b1_c = b1.astype(jnp.float32).reshape(1, E)
    b2_c = b2.astype(jnp.float32).reshape(1, E)

    vmem_limit = _vmem_limit_bytes(
        tile_m, E, x2d.dtype.itemsize, jnp.dtype(out_dtype).itemsize,
        w1_c.dtype.itemsize)

    out2d = pl.pallas_call(
        _ffn_kernel,
        out_shape=jax.ShapeDtypeStruct((M, E), out_dtype),
        grid_spec=pltpu.PrefetchScalarGridSpec(
            num_scalar_prefetch=0,
            grid=grid,
            in_specs=[
                pl.BlockSpec((tile_m, E), lambda i: (i, 0)),   # x tile (native dtype)
                pl.BlockSpec((E, E), lambda i: (0, 0)),        # w1 (resident, const index)
                pl.BlockSpec((1, E), lambda i: (0, 0)),        # b1
                pl.BlockSpec((E, E), lambda i: (0, 0)),        # w2 (resident, const index)
                pl.BlockSpec((1, E), lambda i: (0, 0)),        # b2
            ],
            out_specs=pl.BlockSpec((tile_m, E), lambda i: (i, 0)),
        ),
        compiler_params=pltpu.CompilerParams(
            dimension_semantics=("parallel",),
            vmem_limit_bytes=int(vmem_limit),
        ),
    )(x2d, w1_c, b1_c, w2_c, b2_c)

    return out2d.reshape(*lead, E)


def init_params(key, embed=EMBED_SIZE, dtype=jnp.float32):
    """Deterministic init matching nn.Linear's default U(-1/sqrt(in), 1/sqrt(in))."""
    k1, k2, k3, k4 = jax.random.split(key, 4)
    bound = 1.0 / jnp.sqrt(embed)
    # Stored as [in, out] (transposed relative to PyTorch's [out, in]).
    w1 = jax.random.uniform(k1, (embed, embed), dtype, -bound, bound)
    b1 = jax.random.uniform(k2, (embed,), dtype, -bound, bound)
    w2 = jax.random.uniform(k3, (embed, embed), dtype, -bound, bound)
    b2 = jax.random.uniform(k4, (embed,), dtype, -bound, bound)
    return w1, b1, w2, b2


if __name__ == "__main__":
    key = jax.random.PRNGKey(0)
    kx, kp, kx2 = jax.random.split(key, 3)

    w1, b1, w2, b2 = init_params(kp)
    # Persist bf16 weights once (what a real caller / jitted model would do).
    w1_bf, w2_bf = w1.astype(jnp.bfloat16), w2.astype(jnp.bfloat16)

    # Small deployment shape implied by the module: (batch=2, seq=8, embed=384).
    batch, seq = 2, 8
    x = jax.random.normal(kx, (batch, seq, EMBED_SIZE), jnp.float32)
    out = feed_forward(x, w1_bf, b1, w2_bf, b2)
    jax.block_until_ready(out)

    # Reference with the same bf16-matmul / f32-accumulate math.
    def ref_ffn(xx):
        x2 = xx.reshape(-1, EMBED_SIZE).astype(jnp.bfloat16)
        h = jnp.dot(x2, w1_bf, preferred_element_type=jnp.float32)
        h = jnp.maximum(h + b1, 0.0).astype(jnp.bfloat16)
        y = jnp.dot(h, w2_bf, preferred_element_type=jnp.float32)
        return (y + b2).reshape(xx.shape)

    ref = ref_ffn(x)
    assert jnp.allclose(out, ref, atol=2e-3, rtol=2e-3), "mismatch vs bf16 reference"

    # Loose sanity check against the plain f32 math as well.
    ref_f32 = jnp.maximum(x @ w1 + b1, 0.0) @ w2 + b2
    assert jnp.allclose(out, ref_f32, atol=5e-2, rtol=5e-2), "mismatch vs f32 reference"

    # Exercise the multi-step grid + ragged-tail path (M not a multiple of tile_m).
    M2 = 1040
    x_big = jax.random.normal(kx2, (M2, EMBED_SIZE), jnp.float32)
    out_big = feed_forward(x_big, w1_bf, b1, w2_bf, b2)
    jax.block_until_ready(out_big)
    ref_big = ref_ffn(x_big)
    assert jnp.allclose(out_big, ref_big, atol=2e-3, rtol=2e-3), "mismatch (tiled path)"

    print("KERNEL_OK")
</pallas_src>

<mosaic_0001>
module attributes {stable_mosaic.version = 11 : i64} {
  func.func @_ffn_kernel(%arg0: i32, %arg1: memref<16x384xf32, #tpu.memory_space<vmem>>, %arg2: memref<384x384xbf16, #tpu.memory_space<vmem>>, %arg3: memref<1x384xf32, #tpu.memory_space<vmem>>, %arg4: memref<384x384xbf16, #tpu.memory_space<vmem>>, %arg5: memref<1x384xf32, #tpu.memory_space<vmem>>, %arg6: memref<16x384xf32, #tpu.memory_space<vmem>>) attributes {dimension_semantics = [#tpu.dimension_semantics<parallel>], iteration_bounds = array<i64: 1>, scalar_prefetch = 0 : i64, scratch_operands = 0 : i64, tpu.core_type = #tpu.core_type<tc>, window_params = [{transform_indices = @transform_0, window_bounds = array<i64: 16, 384>}, {pipeline_mode = #tpu.pipeline_mode<synchronous>, transform_indices = @transform_1, window_bounds = array<i64: 384, 384>}, {pipeline_mode = #tpu.pipeline_mode<synchronous>, transform_indices = @transform_2, window_bounds = array<i64: 1, 384>}, {pipeline_mode = #tpu.pipeline_mode<synchronous>, transform_indices = @transform_3, window_bounds = array<i64: 384, 384>}, {pipeline_mode = #tpu.pipeline_mode<synchronous>, transform_indices = @transform_4, window_bounds = array<i64: 1, 384>}, {transform_indices = @transform_5, window_bounds = array<i64: 16, 384>}]} {
    %c0 = arith.constant 0 : index
    %c0_0 = arith.constant 0 : index
    %0 = vector.load %arg1[%c0, %c0_0] : memref<16x384xf32, #tpu.memory_space<vmem>>, vector<16x384xf32>
    %1 = arith.truncf %0 : vector<16x384xf32> to vector<16x384xbf16>
    %c0_1 = arith.constant 0 : index
    %c0_2 = arith.constant 0 : index
    %2 = vector.load %arg2[%c0_1, %c0_2] : memref<384x384xbf16, #tpu.memory_space<vmem>>, vector<384x384xbf16>
    %cst = arith.constant dense<0.000000e+00> : vector<16x384xf32>
    %3 = tpu.matmul %1, %2, %cst {dimension_numbers = #tpu.dot_dimension_numbers<[1], [0], [0], [1], [0, 0, 1, 1], [], []>} : vector<16x384xbf16>, vector<384x384xbf16>, vector<16x384xf32> -> vector<16x384xf32>
    %c0_3 = arith.constant 0 : index
    %c0_4 = arith.constant 0 : index
    %4 = vector.load %arg3[%c0_3, %c0_4] : memref<1x384xf32, #tpu.memory_space<vmem>>, vector<1x384xf32>
    %5 = vector.broadcast %4 : vector<1x384xf32> to vector<16x384xf32>
    %6 = arith.addf %3, %5 : vector<16x384xf32>
    %cst_5 = arith.constant 0.000000e+00 : f32
    %7 = vector.broadcast %cst_5 : f32 to vector<16x384xf32>
    %8 = arith.maximumf %6, %7 : vector<16x384xf32>
    %9 = arith.truncf %8 : vector<16x384xf32> to vector<16x384xbf16>
    %c0_6 = arith.constant 0 : index
    %c0_7 = arith.constant 0 : index
    %10 = vector.load %arg4[%c0_6, %c0_7] : memref<384x384xbf16, #tpu.memory_space<vmem>>, vector<384x384xbf16>
    %cst_8 = arith.constant dense<0.000000e+00> : vector<16x384xf32>
    %11 = tpu.matmul %9, %10, %cst_8 {dimension_numbers = #tpu.dot_dimension_numbers<[1], [0], [0], [1], [0, 0, 1, 1], [], []>} : vector<16x384xbf16>, vector<384x384xbf16>, vector<16x384xf32> -> vector<16x384xf32>
    %c0_9 = arith.constant 0 : index
    %c0_10 = arith.constant 0 : index
    %12 = vector.load %arg5[%c0_9, %c0_10] : memref<1x384xf32, #tpu.memory_space<vmem>>, vector<1x384xf32>
    %13 = vector.broadcast %12 : vector<1x384xf32> to vector<16x384xf32>
    %14 = arith.addf %11, %13 : vector<16x384xf32>
    %c0_11 = arith.constant 0 : index
    %c0_12 = arith.constant 0 : index
    %15 = vector.load %arg6[%c0_11, %c0_12] : memref<16x384xf32, #tpu.memory_space<vmem>>, vector<16x384xf32>
    tpu.vector_store %arg6[%c0_11, %c0_12], %14 {strides = array<i32>} : memref<16x384xf32, #tpu.memory_space<vmem>>, vector<16x384xf32>,
    return
  }
  func.func @transform_0(%arg0: i32) -> (i32, i32) {
    %c0_i32 = arith.constant 0 : i32
    %c0_i32_0 = arith.constant 0 : i32
    return %arg0, %c0_i32 : i32, i32
  }
  func.func @transform_1(%arg0: i32) -> (i32, i32) {
    %c0_i32 = arith.constant 0 : i32
    %c0_i32_0 = arith.constant 0 : i32
    %c0_i32_1 = arith.constant 0 : i32
    return %c0_i32, %c0_i32_0 : i32, i32
  }
  func.func @transform_2(%arg0: i32) -> (i32, i32) {
    %c0_i32 = arith.constant 0 : i32
    %c0_i32_0 = arith.constant 0 : i32
    %c0_i32_1 = arith.constant 0 : i32
    return %c0_i32, %c0_i32_0 : i32, i32
  }
  func.func @transform_3(%arg0: i32) -> (i32, i32) {
    %c0_i32 = arith.constant 0 : i32
    %c0_i32_0 = arith.constant 0 : i32
    %c0_i32_1 = arith.constant 0 : i32
    return %c0_i32, %c0_i32_0 : i32, i32
  }
  func.func @transform_4(%arg0: i32) -> (i32, i32) {
    %c0_i32 = arith.constant 0 : i32
    %c0_i32_0 = arith.constant 0 : i32
    %c0_i32_1 = arith.constant 0 : i32
    return %c0_i32, %c0_i32_0 : i32, i32
  }
  func.func @transform_5(%arg0: i32) -> (i32, i32) {
    %c0_i32 = arith.constant 0 : i32
    %c0_i32_0 = arith.constant 0 : i32
    return %arg0, %c0_i32 : i32, i32
  }
}

</mosaic_0001>

<llo_original>
// kernel: tpu_custom_call.1
$region0: #{tpu_custom_call.1}
  #allocation0 [shape = 'u32[]', space=smem, size = 0x4, offset = 0x4, fixed_abs, tag = 'smem constant byte address 0x4 - core index']
  #allocation1 [shape = 'u32[144,128]{1,0:T(1,128)}', space=vmem, size = 0x12000, scoped, tag = 'internal scratch']
  %s0 = inlined_call_operand.hbm [shape: f32[16,384], index: 0, kind: input, shape index: {}]
  %s1 = inlined_call_operand.hbm [shape: bf16[384,384], index: 1, kind: input, shape index: {}]
  %s2 = inlined_call_operand.vmem [shape: f32[1,384], index: 2, kind: input, shape index: {}]
  %s3 = inlined_call_operand.hbm [shape: bf16[384,384], index: 3, kind: input, shape index: {}]
  %s4 = inlined_call_operand.vmem [shape: f32[1,384], index: 4, kind: input, shape index: {}]
  %s5 = inlined_call_operand.hbm [shape: f32[16,384], index: 5, kind: output, shape index: {}]
  %s6 = sld [smem:[#allocation0]]
  $region42: #{tpu_custom_call.1} parent=0
    _
  %s8 = ssub.s32 1, %s6
  %s9 = scalar_select 0, %s8, %s6
  $region1: #{tpu_custom_call.1} parent=0
    #allocation2 [shape = 'u8[24576]{0}', space=vmem, size = 0x6000, scoped, tag = 'input window, operand 0, single buffered']
    #allocation3 [shape = 's32[1]{0}', space=sflag, size = 0x4, scoped, tag = 'scoped memory for tpu_custom_call.1']
    #allocation4 [shape = 's32[1]{0}', space=sflag, size = 0x4, scoped, tag = 'scoped memory for tpu_custom_call.1']
    #allocation5 [shape = 'u8[294912]{0}', space=vmem, size = 0x48000, scoped, tag = 'input window, operand 1, single buffered']
    #allocation6 [shape = 's32[1]{0}', space=sflag, size = 0x4, scoped, tag = 'scoped memory for tpu_custom_call.1']
    #allocation7 [shape = 'u8[294912]{0}', space=vmem, size = 0x48000, scoped, tag = 'input window, operand 3, single buffered']
    #allocation8 [shape = 'u8[24576]{0}', space=vmem, size = 0x6000, scoped, tag = 'output window, operand 0, single buffered']
    %10 = vsyncpa [#allocation3], 0
    %11 = vsyncpa [#allocation6], 0
    %12 = vsyncpa [#allocation4], 0
    // Predicated region
    $region2: #{tpu_custom_call.1} parent=1 // pred_check
      _
    $region3: #{tpu_custom_call.1} parent=1 // pred_check_branch
      %14 = sbr.rel (0) target = $region5
    $region4: #{tpu_custom_call.1} parent=1 // pred_region
      %s16 = ssub.s32 768, 768
      %17 = vsyncadd [#allocation3], %s16
      %s18 = sshll.u32 [#allocation2], 4
      %s19 = int_to_ptr.vmem [resolvable:$true] %s18
      %24 = dma.hbm_to_vmem [thread:$0]  %s0, 768, %s19, [#allocation3], 384, 384, 24
    $region5: #{tpu_custom_call.1} parent=1 // pred_fallthru
      _
    // Predicated region
    $region6: #{tpu_custom_call.1} parent=1 // pred_check
      _
    $region7: #{tpu_custom_call.1} parent=1 // pred_check_branch
      %26 = sbr.rel (0) target = $region9
    $region8: #{tpu_custom_call.1} parent=1 // pred_region
      %s28 = ssub.s32 9216, 9216
      %29 = vsyncadd [#allocation6], %s28
      %s30 = sshll.u32 [#allocation5], 4
      %s31 = int_to_ptr.vmem [resolvable:$true] %s30
      %36 = dma.hbm_to_vmem [thread:$0]  %s1, 9216, %s31, [#allocation6], 192, 192, 12
    $region9: #{tpu_custom_call.1} parent=1 // pred_fallthru
      _
    // Predicated region
    $region10: #{tpu_custom_call.1} parent=1 // pred_check
      _
    $region11: #{tpu_custom_call.1} parent=1 // pred_check_branch
      %38 = sbr.rel (0) target = $region13
    $region12: #{tpu_custom_call.1} parent=1 // pred_region
      _
    $region13: #{tpu_custom_call.1} parent=1 // pred_fallthru
      _
    // Predicated region
    $region14: #{tpu_custom_call.1} parent=1 // pred_check
      _
    $region15: #{tpu_custom_call.1} parent=1 // pred_check_branch
      %40 = sbr.rel (0) target = $region17
    $region16: #{tpu_custom_call.1} parent=1 // pred_region
      %s42 = ssub.s32 9216, 9216
      %43 = vsyncadd [#allocation6], %s42
      %s44 = sshll.u32 [#allocation7], 4
      %s45 = int_to_ptr.vmem [resolvable:$true] %s44
      %50 = dma.hbm_to_vmem [thread:$0]  %s3, 9216, %s45, [#allocation6], 192, 192, 12
    $region17: #{tpu_custom_call.1} parent=1 // pred_fallthru
      _
    // Predicated region
    $region18: #{tpu_custom_call.1} parent=1 // pred_check
      _
    $region19: #{tpu_custom_call.1} parent=1 // pred_check_branch
      %52 = sbr.rel (0) target = $region21
    $region20: #{tpu_custom_call.1} parent=1 // pred_region
      _
    $region21: #{tpu_custom_call.1} parent=1 // pred_fallthru
      _
    // Predicated region
    $region22: #{tpu_custom_call.1} parent=1 // pred_check
      _
    $region23: #{tpu_custom_call.1} parent=1 // pred_check_branch
      %54 = sbr.rel (0) target = $region25
    $region24: #{tpu_custom_call.1} parent=1 // pred_region
      %55 = dma.done [#allocation3], 768
    $region25: #{tpu_custom_call.1} parent=1 // pred_fallthru
      _
    // Predicated region
    $region26: #{tpu_custom_call.1} parent=1 // pred_check
      _
    $region27: #{tpu_custom_call.1} parent=1 // pred_check_branch
      %57 = sbr.rel (0) target = $region29
    $region28: #{tpu_custom_call.1} parent=1 // pred_region
      %58 = dma.done [#allocation6], 9216
    $region29: #{tpu_custom_call.1} parent=1 // pred_fallthru
      _
    // Predicated region
    $region30: #{tpu_custom_call.1} parent=1 // pred_check
      _
    $region31: #{tpu_custom_call.1} parent=1 // pred_check_branch
      %60 = sbr.rel (0) target = $region33
    $region32: #{tpu_custom_call.1} parent=1 // pred_region
      %61 = dma.done [#allocation6], 9216
    $region33: #{tpu_custom_call.1} parent=1 // pred_fallthru
      _
    %v63 = vld [vmem:[#allocation2] sm:$0xff]
    %v64 = vld [vmem:[#allocation2 + $0x8] sm:$0xff]
    %v65 = vld [vmem:[#allocation2 + $0x10] sm:$0xff]
    %v66 = vld [vmem:[#allocation2 + $0x18] sm:$0xff]
    %v67 = vld [vmem:[#allocation2 + $0x20] sm:$0xff]
    %v68 = vld [vmem:[#allocation2 + $0x28] sm:$0xff]
    %v69 = vpack.c.bf16 %v66, %v63
    %v70 = vpack.c.bf16 %v67, %v64
    %v71 = vpack.c.bf16 %v68, %v65
    %v72 = vld [vmem:[#allocation5] sm:$0xff]
    %v73 = vld [vmem:[#allocation5 + $0x8] sm:$0xf]
    %v74 = vld [vmem:[#allocation5 + $0xc] sm:$0xff]
    %v75 = vld [vmem:[#allocation5 + $0x14] sm:$0xf]
    %v76 = vld [vmem:[#allocation5 + $0x18] sm:$0xff]
    %v77 = vld [vmem:[#allocation5 + $0x20] sm:$0xf]
    %v78 = vld [vmem:[#allocation5 + $0x24] sm:$0xff]
    %v79 = vld [vmem:[#allocation5 + $0x2c] sm:$0xf]
    %v80 = vld [vmem:[#allocation5 + $0x30] sm:$0xff]
    %v81 = vld [vmem:[#allocation5 + $0x38] sm:$0xf]
    %v82 = vld [vmem:[#allocation5 + $0x3c] sm:$0xff]
    %v83 = vld [vmem:[#allocation5 + $0x44] sm:$0xf]
    %v84 = vld [vmem:[#allocation5 + $0x48] sm:$0xff]
    %v85 = vld [vmem:[#allocation5 + $0x50] sm:$0xf]
    %v86 = vld [vmem:[#allocation5 + $0x54] sm:$0xff]
    %v87 = vld [vmem:[#allocation5 + $0x5c] sm:$0xf]
    %v88 = vld [vmem:[#allocation5 + $0x60] sm:$0xff]
    %v89 = vld [vmem:[#allocation5 + $0x68] sm:$0xf]
    %v90 = vld [vmem:[#allocation5 + $0x6c] sm:$0xff]
    %v91 = vld [vmem:[#allocation5 + $0x74] sm:$0xf]
    %v92 = vld [vmem:[#allocation5 + $0x78] sm:$0xff]
    %v93 = vld [vmem:[#allocation5 + $0x80] sm:$0xf]
    %v94 = vld [vmem:[#allocation5 + $0x84] sm:$0xff]
    %v95 = vld [vmem:[#allocation5 + $0x8c] sm:$0xf]
    %v96 = vld [vmem:[#allocation5 + $0x90] sm:$0xff]
    %v97 = vld [vmem:[#allocation5 + $0x98] sm:$0xf]
    %v98 = vld [vmem:[#allocation5 + $0x9c] sm:$0xff]
    %v99 = vld [vmem:[#allocation5 + $0xa4] sm:$0xf]
    %v100 = vld [vmem:[#allocation5 + $0xa8] sm:$0xff]
    %v101 = vld [vmem:[#allocation5 + $0xb0] sm:$0xf]
    %v102 = vld [vmem:[#allocation5 + $0xb4] sm:$0xff]
    %v103 = vld [vmem:[#allocation5 + $0xbc] sm:$0xf]
    %v104 = vld [vmem:[#allocation5 + $0xc0] sm:$0xff]
    %v105 = vld [vmem:[#allocation5 + $0xc8] sm:$0xf]
    %v106 = vld [vmem:[#allocation5 + $0xcc] sm:$0xff]
    %v107 = vld [vmem:[#allocation5 + $0xd4] sm:$0xf]
    %v108 = vld [vmem:[#allocation5 + $0xd8] sm:$0xff]
    %v109 = vld [vmem:[#allocation5 + $0xe0] sm:$0xf]
    %v110 = vld [vmem:[#allocation5 + $0xe4] sm:$0xff]
    %v111 = vld [vmem:[#allocation5 + $0xec] sm:$0xf]
    %v112 = vld [vmem:[#allocation5 + $0xf0] sm:$0xff]
    %v113 = vld [vmem:[#allocation5 + $0xf8] sm:$0xf]
    %v114 = vld [vmem:[#allocation5 + $0xfc] sm:$0xff]
    %v115 = vld [vmem:[#allocation5 + $0x104] sm:$0xf]
    %v116 = vld [vmem:[#allocation5 + $0x108] sm:$0xff]
    %v117 = vld [vmem:[#allocation5 + $0x110] sm:$0xf]
    %v118 = vld [vmem:[#allocation5 + $0x114] sm:$0xff]
    %v119 = vld [vmem:[#allocation5 + $0x11c] sm:$0xf]
    %v120 = vld [vmem:[#allocation5 + $0x120] sm:$0xff]
    %v121 = vld [vmem:[#allocation5 + $0x128] sm:$0xf]
    %v122 = vld [vmem:[#allocation5 + $0x12c] sm:$0xff]
    %v123 = vld [vmem:[#allocation5 + $0x134] sm:$0xf]
    %v124 = vld [vmem:[#allocation5 + $0x138] sm:$0xff]
    %v125 = vld [vmem:[#allocation5 + $0x140] sm:$0xf]
    %v126 = vld [vmem:[#allocation5 + $0x144] sm:$0xff]
    %v127 = vld [vmem:[#allocation5 + $0x14c] sm:$0xf]
    %v128 = vld [vmem:[#allocation5 + $0x150] sm:$0xff]
    %v129 = vld [vmem:[#allocation5 + $0x158] sm:$0xf]
    %v130 = vld [vmem:[#allocation5 + $0x15c] sm:$0xff]
    %v131 = vld [vmem:[#allocation5 + $0x164] sm:$0xf]
    %v132 = vld [vmem:[#allocation5 + $0x168] sm:$0xff]
    %v133 = vld [vmem:[#allocation5 + $0x170] sm:$0xf]
    %v134 = vld [vmem:[#allocation5 + $0x174] sm:$0xff]
    %v135 = vld [vmem:[#allocation5 + $0x17c] sm:$0xf]
    %v136 = vld [vmem:[#allocation5 + $0x180] sm:$0xff]
    %v137 = vld [vmem:[#allocation5 + $0x188] sm:$0xf]
    %v138 = vld [vmem:[#allocation5 + $0x18c] sm:$0xff]
    %v139 = vld [vmem:[#allocation5 + $0x194] sm:$0xf]
    %v140 = vld [vmem:[#allocation5 + $0x198] sm:$0xff]
    %v141 = vld [vmem:[#allocation5 + $0x1a0] sm:$0xf]
    %v142 = vld [vmem:[#allocation5 + $0x1a4] sm:$0xff]
    %v143 = vld [vmem:[#allocation5 + $0x1ac] sm:$0xf]
    %v144 = vld [vmem:[#allocation5 + $0x1b0] sm:$0xff]
    %v145 = vld [vmem:[#allocation5 + $0x1b8] sm:$0xf]
    %v146 = vld [vmem:[#allocation5 + $0x1bc] sm:$0xff]
    %v147 = vld [vmem:[#allocation5 + $0x1c4] sm:$0xf]
    %v148 = vld [vmem:[#allocation5 + $0x1c8] sm:$0xff]
    %v149 = vld [vmem:[#allocation5 + $0x1d0] sm:$0xf]
    %v150 = vld [vmem:[#allocation5 + $0x1d4] sm:$0xff]
    %v151 = vld [vmem:[#allocation5 + $0x1dc] sm:$0xf]
    %v152 = vld [vmem:[#allocation5 + $0x1e0] sm:$0xff]
    %v153 = vld [vmem:[#allocation5 + $0x1e8] sm:$0xf]
    %v154 = vld [vmem:[#allocation5 + $0x1ec] sm:$0xff]
    %v155 = vld [vmem:[#allocation5 + $0x1f4] sm:$0xf]
    %v156 = vld [vmem:[#allocation5 + $0x1f8] sm:$0xff]
    %v157 = vld [vmem:[#allocation5 + $0x200] sm:$0xf]
    %v158 = vld [vmem:[#allocation5 + $0x204] sm:$0xff]
    %v159 = vld [vmem:[#allocation5 + $0x20c] sm:$0xf]
    %v160 = vld [vmem:[#allocation5 + $0x210] sm:$0xff]
    %v161 = vld [vmem:[#allocation5 + $0x218] sm:$0xf]
    %v162 = vld [vmem:[#allocation5 + $0x21c] sm:$0xff]
    %v163 = vld [vmem:[#allocation5 + $0x224] sm:$0xf]
    %v164 = vld [vmem:[#allocation5 + $0x228] sm:$0xff]
    %v165 = vld [vmem:[#allocation5 + $0x230] sm:$0xf]
    %v166 = vld [vmem:[#allocation5 + $0x234] sm:$0xff]
    %v167 = vld [vmem:[#allocation5 + $0x23c] sm:$0xf]
    %v168 = vld [vmem:[%s2] sm:$0x7]
    %v170 = vlaneseq
    %v171 = vshrl.u32 %v170, 7
    %v172 = vsub.s32 0, %v171
    %v173 = vrot.slane %v168, %v172
    %v174 = vlaneseq
    %v175 = vshrl.u32 %v174, 7
    %v176 = vsub.s32 1, %v175
    %v177 = vrot.slane %v168, %v176
    %v178 = vlaneseq
    %v179 = vshrl.u32 %v178, 7
    %v180 = vsub.s32 2, %v179
    %v181 = vrot.slane %v168, %v180
    %v281 = vunpack.c.l.b16 %v72
    %v282 = vunpack.c.h.b16 %v72
    %v283 = vunpack.c.l.b16 %v73
    %v284 = vunpack.c.l.b16 %v74
    %v285 = vunpack.c.h.b16 %v74
    %v286 = vunpack.c.l.b16 %v75
    %v287 = vunpack.c.l.b16 %v76
    %v288 = vunpack.c.h.b16 %v76
    %v289 = vunpack.c.l.b16 %v77
    %v290 = vunpack.c.l.b16 %v78
    %v291 = vunpack.c.h.b16 %v78
    %v292 = vunpack.c.l.b16 %v79
    %v293 = vunpack.c.l.b16 %v80
    %v294 = vunpack.c.h.b16 %v80
    %v295 = vunpack.c.l.b16 %v81
    %v296 = vunpack.c.l.b16 %v82
    %v297 = vunpack.c.h.b16 %v82
    %v298 = vunpack.c.l.b16 %v83
    %v299 = vunpack.c.l.b16 %v84
    %v300 = vunpack.c.h.b16 %v84
    %v301 = vunpack.c.l.b16 %v85
    %v302 = vunpack.c.l.b16 %v86
    %v303 = vunpack.c.h.b16 %v86
    %v304 = vunpack.c.l.b16 %v87
    %v305 = vunpack.c.l.b16 %v88
    %v306 = vunpack.c.h.b16 %v88
    %v307 = vunpack.c.l.b16 %v89
    %v308 = vunpack.c.l.b16 %v90
    %v309 = vunpack.c.h.b16 %v90
    %v310 = vunpack.c.l.b16 %v91
    %v311 = vunpack.c.l.b16 %v92
    %v312 = vunpack.c.h.b16 %v92
    %v313 = vunpack.c.l.b16 %v93
    %v314 = vunpack.c.l.b16 %v94
    %v315 = vunpack.c.h.b16 %v94
    %v316 = vunpack.c.l.b16 %v95
    %v317 = vunpack.c.l.b16 %v96
    %v318 = vunpack.c.h.b16 %v96
    %v319 = vunpack.c.l.b16 %v97
    %v320 = vunpack.c.l.b16 %v98
    %v321 = vunpack.c.h.b16 %v98
    %v322 = vunpack.c.l.b16 %v99
    %v323 = vunpack.c.l.b16 %v100
    %v324 = vunpack.c.h.b16 %v100
    %v325 = vunpack.c.l.b16 %v101
    %v326 = vunpack.c.l.b16 %v102
    %v327 = vunpack.c.h.b16 %v102
    %v328 = vunpack.c.l.b16 %v103
    %v329 = vunpack.c.l.b16 %v104
    %v330 = vunpack.c.h.b16 %v104
    %v331 = vunpack.c.l.b16 %v105
    %v332 = vunpack.c.l.b16 %v106
    %v333 = vunpack.c.h.b16 %v106
    %v334 = vunpack.c.l.b16 %v107
    %v335 = vunpack.c.l.b16 %v108
    %v336 = vunpack.c.h.b16 %v108
    %v337 = vunpack.c.l.b16 %v109
    %v338 = vunpack.c.l.b16 %v110
    %v339 = vunpack.c.h.b16 %v110
    %v340 = vunpack.c.l.b16 %v111
    %v341 = vunpack.c.l.b16 %v112
    %v342 = vunpack.c.h.b16 %v112
    %v343 = vunpack.c.l.b16 %v113
    %v344 = vunpack.c.l.b16 %v114
    %v345 = vunpack.c.h.b16 %v114
    %v346 = vunpack.c.l.b16 %v115
    %v347 = vunpack.c.l.b16 %v116
    %v348 = vunpack.c.h.b16 %v116
    %v349 = vunpack.c.l.b16 %v117
    %v350 = vunpack.c.l.b16 %v118
    %v351 = vunpack.c.h.b16 %v118
    %v352 = vunpack.c.l.b16 %v119
    %v353 = vunpack.c.l.b16 %v120
    %v354 = vunpack.c.h.b16 %v120
    %v355 = vunpack.c.l.b16 %v121
    %v356 = vunpack.c.l.b16 %v122
    %v357 = vunpack.c.h.b16 %v122
    %v358 = vunpack.c.l.b16 %v123
    %v359 = vunpack.c.l.b16 %v124
    %v360 = vunpack.c.h.b16 %v124
    %v361 = vunpack.c.l.b16 %v125
    %v362 = vunpack.c.l.b16 %v126
    %v363 = vunpack.c.h.b16 %v126
    %v364 = vunpack.c.l.b16 %v127
    %v365 = vunpack.c.l.b16 %v128
    %v366 = vunpack.c.h.b16 %v128
    %v367 = vunpack.c.l.b16 %v129
    %v368 = vunpack.c.l.b16 %v130
    %v369 = vunpack.c.h.b16 %v130
    %v370 = vunpack.c.l.b16 %v131
    %v371 = vunpack.c.l.b16 %v132
    %v372 = vunpack.c.h.b16 %v132
    %v373 = vunpack.c.l.b16 %v133
    %v374 = vunpack.c.l.b16 %v134
    %v375 = vunpack.c.h.b16 %v134
    %v376 = vunpack.c.l.b16 %v135
    %v377 = vunpack.c.l.b16 %v136
    %v378 = vunpack.c.h.b16 %v136
    %v379 = vunpack.c.l.b16 %v137
    %v380 = vunpack.c.l.b16 %v138
    %v381 = vunpack.c.h.b16 %v138
    %v382 = vunpack.c.l.b16 %v139
    %v383 = vunpack.c.l.b16 %v140
    %v384 = vunpack.c.h.b16 %v140
    %v385 = vunpack.c.l.b16 %v141
    %v386 = vunpack.c.l.b16 %v142
    %v387 = vunpack.c.h.b16 %v142
    %v388 = vunpack.c.l.b16 %v143
    %v389 = vunpack.c.l.b16 %v144
    %v390 = vunpack.c.h.b16 %v144
    %v391 = vunpack.c.l.b16 %v145
    %v392 = vunpack.c.l.b16 %v146
    %v393 = vunpack.c.h.b16 %v146
    %v394 = vunpack.c.l.b16 %v147
    %v395 = vunpack.c.l.b16 %v148
    %v396 = vunpack.c.h.b16 %v148
    %v397 = vunpack.c.l.b16 %v149
    %v398 = vunpack.c.l.b16 %v150
    %v399 = vunpack.c.h.b16 %v150
    %v400 = vunpack.c.l.b16 %v151
    %v401 = vunpack.c.l.b16 %v152
    %v402 = vunpack.c.h.b16 %v152
    %v403 = vunpack.c.l.b16 %v153
    %v404 = vunpack.c.l.b16 %v154
    %v405 = vunpack.c.h.b16 %v154
    %v406 = vunpack.c.l.b16 %v155
    %v407 = vunpack.c.l.b16 %v156
    %v408 = vunpack.c.h.b16 %v156
    %v409 = vunpack.c.l.b16 %v157
    %v410 = vunpack.c.l.b16 %v158
    %v411 = vunpack.c.h.b16 %v158
    %v412 = vunpack.c.l.b16 %v159
    %v413 = vunpack.c.l.b16 %v160
    %v414 = vunpack.c.h.b16 %v160
    %v415 = vunpack.c.l.b16 %v161
    %v416 = vunpack.c.l.b16 %v162
    %v417 = vunpack.c.h.b16 %v162
    %v418 = vunpack.c.l.b16 %v163
    %v419 = vunpack.c.l.b16 %v164
    %v420 = vunpack.c.h.b16 %v164
    %v421 = vunpack.c.l.b16 %v165
    %v422 = vunpack.c.l.b16 %v166
    %v423 = vunpack.c.h.b16 %v166
    %v424 = vunpack.c.l.b16 %v167
    %v425 = vpack.c.b16 %v284, %v281
    %v426 = vpack.c.b16 %v285, %v282
    %v427 = vpack.c.b16 %v286, %v283
    %v428 = vpack.c.b16 %v290, %v287
    %v429 = vpack.c.b16 %v291, %v288
    %v430 = vpack.c.b16 %v292, %v289
    %v431 = vpack.c.b16 %v296, %v293
    %v432 = vpack.c.b16 %v297, %v294
    %v433 = vpack.c.b16 %v298, %v295
    %v434 = vpack.c.b16 %v302, %v299
    %v435 = vpack.c.b16 %v303, %v300
    %v436 = vpack.c.b16 %v304, %v301
    %v437 = vpack.c.b16 %v308, %v305
    %v438 = vpack.c.b16 %v309, %v306
    %v439 = vpack.c.b16 %v310, %v307
    %v440 = vpack.c.b16 %v314, %v311
    %v441 = vpack.c.b16 %v315, %v312
    %v442 = vpack.c.b16 %v316, %v313
    %v443 = vpack.c.b16 %v320, %v317
    %v444 = vpack.c.b16 %v321, %v318
    %v445 = vpack.c.b16 %v322, %v319
    %v446 = vpack.c.b16 %v326, %v323
    %v447 = vpack.c.b16 %v327, %v324
    %v448 = vpack.c.b16 %v328, %v325
    %v449 = vpack.c.b16 %v332, %v329
    %v450 = vpack.c.b16 %v333, %v330
    %v451 = vpack.c.b16 %v334, %v331
    %v452 = vpack.c.b16 %v338, %v335
    %v453 = vpack.c.b16 %v339, %v336
    %v454 = vpack.c.b16 %v340, %v337
    %v455 = vpack.c.b16 %v344, %v341
    %v456 = vpack.c.b16 %v345, %v342
    %v457 = vpack.c.b16 %v346, %v343
    %v458 = vpack.c.b16 %v350, %v347
    %v459 = vpack.c.b16 %v351, %v348
    %v460 = vpack.c.b16 %v352, %v349
    %v461 = vpack.c.b16 %v356, %v353
    %v462 = vpack.c.b16 %v357, %v354
    %v463 = vpack.c.b16 %v358, %v355
    %v464 = vpack.c.b16 %v362, %v359
    %v465 = vpack.c.b16 %v363, %v360
    %v466 = vpack.c.b16 %v364, %v361
    %v467 = vpack.c.b16 %v368, %v365
    %v468 = vpack.c.b16 %v369, %v366
    %v469 = vpack.c.b16 %v370, %v367
    %v470 = vpack.c.b16 %v374, %v371
    %v471 = vpack.c.b16 %v375, %v372
    %v472 = vpack.c.b16 %v376, %v373
    %v473 = vpack.c.b16 %v380, %v377
    %v474 = vpack.c.b16 %v381, %v378
    %v475 = vpack.c.b16 %v382, %v379
    %v476 = vpack.c.b16 %v386, %v383
    %v477 = vpack.c.b16 %v387, %v384
    %v478 = vpack.c.b16 %v388, %v385
    %v479 = vpack.c.b16 %v392, %v389
    %v480 = vpack.c.b16 %v393, %v390
    %v481 = vpack.c.b16 %v394, %v391
    %v482 = vpack.c.b16 %v398, %v395
    %v483 = vpack.c.b16 %v399, %v396
    %v484 = vpack.c.b16 %v400, %v397
    %v485 = vpack.c.b16 %v404, %v401
    %v486 = vpack.c.b16 %v405, %v402
    %v487 = vpack.c.b16 %v406, %v403
    %v488 = vpack.c.b16 %v410, %v407
    %v489 = vpack.c.b16 %v411, %v408
    %v490 = vpack.c.b16 %v412, %v409
    %v491 = vpack.c.b16 %v416, %v413
    %v492 = vpack.c.b16 %v417, %v414
    %v493 = vpack.c.b16 %v418, %v415
    %v494 = vpack.c.b16 %v422, %v419
    %v495 = vpack.c.b16 %v423, %v420
    %v496 = vpack.c.b16 %v424, %v421
    %569 = vmatprep.subr.bf16.mxu0 %v447
    %570 = vmatpush1.bf16.msra.mxu0 %v446
    %571 = vmatprep.subr.bf16.mxu0 %v444
    %572 = vmatpush1.bf16.msra.mxu0 %v443
    %573 = vmatprep.subr.bf16.mxu0 %v441
    %574 = vmatpush1.bf16.msra.mxu0 %v440
    %575 = vmatprep.subr.bf16.mxu0 %v438
    %576 = vmatpush1.bf16.msra.mxu0 %v437
    %577 = vmatprep.subr.bf16.mxu0 %v435
    %578 = vmatpush1.bf16.msra.mxu0 %v434
    %579 = vmatprep.subr.bf16.mxu0 %v432
    %580 = vmatpush1.bf16.msra.mxu0 %v431
    %581 = vmatprep.subr.bf16.mxu0 %v429
    %582 = vmatpush1.bf16.msra.mxu0 %v428
    %583 = vmatprep.subr.bf16.mxu0 %v426
    %584 = vmatpush1.bf16.msra.mxu0 %v425
    %585 = vmatprep.subr.bf16.mxu0 %v471
    %586 = vmatpush2.bf16.msra.mxu0 %v470
    %587 = vmatprep.subr.bf16.mxu0 %v468
    %588 = vmatpush2.bf16.msra.mxu0 %v467
    %589 = vmatprep.subr.bf16.mxu0 %v465
    %590 = vmatpush2.bf16.msra.mxu0 %v464
    %591 = vmatprep.subr.bf16.mxu0 %v462
    %592 = vmatpush2.bf16.msra.mxu0 %v461
    %593 = vmatprep.subr.bf16.mxu0 %v459
    %594 = vmatpush2.bf16.msra.mxu0 %v458
    %595 = vmatprep.subr.bf16.mxu0 %v456
    %596 = vmatpush2.bf16.msra.mxu0 %v455
    %597 = vmatprep.subr.bf16.mxu0 %v453
    %598 = vmatpush2.bf16.msra.mxu0 %v452
    %599 = vmatprep.subr.bf16.mxu0 %v450
    %600 = vmatpush2.bf16.msra.mxu0 %v449
    %601 = vmatprep.mubr.bf16.mxu0 %v70
    %602 = vmatmul.mubr.bf16.gmra.mxu0 %v69
    %v603 = vpop.f32.mrf.mxu0
    %v604 = vadd.f32 %v173, %v603
    %v605 = vpop.f32.mrf.mxu0
    %v606 = vadd.f32 %v177, %v605
    %v607 = vpop.f32.mrf.mxu0
    %v608 = vadd.f32 %v173, %v607
    %v609 = vpop.f32.mrf.mxu0
    %v610 = vadd.f32 %v177, %v609
    %611 = vdwg.mxu0
    %612 = vmatprep.subr.bf16.mxu0 %v495
    %613 = vmatpush1.bf16.msra.mxu0 %v494
    %614 = vmatprep.subr.bf16.mxu0 %v492
    %615 = vmatpush1.bf16.msra.mxu0 %v491
    %616 = vmatprep.subr.bf16.mxu0 %v489
    %617 = vmatpush1.bf16.msra.mxu0 %v488
    %618 = vmatprep.subr.bf16.mxu0 %v486
    %619 = vmatpush1.bf16.msra.mxu0 %v485
    %620 = vmatprep.subr.bf16.mxu0 %v483
    %621 = vmatpush1.bf16.msra.mxu0 %v482
    %622 = vmatprep.subr.bf16.mxu0 %v480
    %623 = vmatpush1.bf16.msra.mxu0 %v479
    %624 = vmatprep.subr.bf16.mxu0 %v477
    %625 = vmatpush1.bf16.msra.mxu0 %v476
    %626 = vmatprep.subr.bf16.mxu0 %v474
    %627 = vmatpush1.bf16.msra.mxu0 %v473
    %628 = vmatprep.subr.bf16.mxu0 0
    %629 = vmatpush2.bf16.msra.mxu0 0
    %630 = vmatprep.subr.bf16.mxu0 0
    %631 = vmatpush2.bf16.msra.mxu0 0
    %632 = vmatprep.subr.bf16.mxu0 0
    %633 = vmatpush2.bf16.msra.mxu0 0
    %634 = vmatprep.subr.bf16.mxu0 0
    %635 = vmatpush2.bf16.msra.mxu0 0
    %636 = vmatprep.subr.bf16.mxu0 0
    %637 = vmatpush2.bf16.msra.mxu0 0
    %638 = vmatprep.subr.bf16.mxu0 0
    %639 = vmatpush2.bf16.msra.mxu0 0
    %640 = vmatprep.subr.bf16.mxu0 0
    %641 = vmatpush2.bf16.msra.mxu0 0
    %642 = vmatprep.subr.bf16.mxu0 0
    %643 = vmatpush2.bf16.msra.mxu0 0
    %644 = vmatprep.mubr.bf16.mxu0 0
    %645 = vmatmul.mubr.bf16.gmra.mxu0 %v71
    %v646 = vpop.f32.mrf.mxu0
    %v647 = vadd.f32 %v604, %v646
    %v648 = vpop.f32.mrf.mxu0
    %v649 = vadd.f32 %v606, %v648
    %v650 = vpop.f32.mrf.mxu0
    %v651 = vadd.f32 %v608, %v650
    %v652 = vpop.f32.mrf.mxu0
    %v653 = vadd.f32 %v610, %v652
    %654 = vdwg.mxu0
    %655 = vmatprep.subr.bf16.mxu0 0
    %656 = vmatpush1.bf16.msra.mxu0 %v448
    %657 = vmatprep.subr.bf16.mxu0 0
    %658 = vmatpush1.bf16.msra.mxu0 %v445
    %659 = vmatprep.subr.bf16.mxu0 0
    %660 = vmatpush1.bf16.msra.mxu0 %v442
    %661 = vmatprep.subr.bf16.mxu0 0
    %662 = vmatpush1.bf16.msra.mxu0 %v439
    %663 = vmatprep.subr.bf16.mxu0 0
    %664 = vmatpush1.bf16.msra.mxu0 %v436
    %665 = vmatprep.subr.bf16.mxu0 0
    %666 = vmatpush1.bf16.msra.mxu0 %v433
    %667 = vmatprep.subr.bf16.mxu0 0
    %668 = vmatpush1.bf16.msra.mxu0 %v430
    %669 = vmatprep.subr.bf16.mxu0 0
    %670 = vmatpush1.bf16.msra.mxu0 %v427
    %671 = vmatprep.subr.bf16.mxu0 0
    %672 = vmatpush2.bf16.msra.mxu0 %v472
    %673 = vmatprep.subr.bf16.mxu0 0
    %674 = vmatpush2.bf16.msra.mxu0 %v469
    %675 = vmatprep.subr.bf16.mxu0 0
    %676 = vmatpush2.bf16.msra.mxu0 %v466
    %677 = vmatprep.subr.bf16.mxu0 0
    %678 = vmatpush2.bf16.msra.mxu0 %v463
    %679 = vmatprep.subr.bf16.mxu0 0
    %680 = vmatpush2.bf16.msra.mxu0 %v460
    %681 = vmatprep.subr.bf16.mxu0 0
    %682 = vmatpush2.bf16.msra.mxu0 %v457
    %683 = vmatprep.subr.bf16.mxu0 0
    %684 = vmatpush2.bf16.msra.mxu0 %v454
    %685 = vmatprep.subr.bf16.mxu0 0
    %686 = vmatpush2.bf16.msra.mxu0 %v451
    %687 = vmatprep.mubr.bf16.mxu0 %v70
    %688 = vmatmul.mubr.bf16.gmra.mxu0 %v69
    %v689 = vpop.f32.mrf.mxu0
    %v690 = vadd.f32 %v181, %v689
    %v691 = vpop.f32.mrf.mxu0
    %v692 = vpop.f32.mrf.mxu0
    %v693 = vadd.f32 %v181, %v692
    %v694 = vpop.f32.mrf.mxu0
    %695 = vdwg.mxu0
    %696 = vmatprep.subr.bf16.mxu0 0
    %697 = vmatpush1.bf16.msra.mxu0 %v496
    %698 = vmatprep.subr.bf16.mxu0 0
    %699 = vmatpush1.bf16.msra.mxu0 %v493
    %700 = vmatprep.subr.bf16.mxu0 0
    %701 = vmatpush1.bf16.msra.mxu0 %v490
    %702 = vmatprep.subr.bf16.mxu0 0
    %703 = vmatpush1.bf16.msra.mxu0 %v487
    %704 = vmatprep.subr.bf16.mxu0 0
    %705 = vmatpush1.bf16.msra.mxu0 %v484
    %706 = vmatprep.subr.bf16.mxu0 0
    %707 = vmatpush1.bf16.msra.mxu0 %v481
    %708 = vmatprep.subr.bf16.mxu0 0
    %709 = vmatpush1.bf16.msra.mxu0 %v478
    %710 = vmatprep.subr.bf16.mxu0 0
    %711 = vmatpush1.bf16.msra.mxu0 %v475
    %712 = vmatprep.subr.bf16.mxu0 0
    %713 = vmatpush2.bf16.msra.mxu0 0
    %714 = vmatprep.subr.bf16.mxu0 0
    %715 = vmatpush2.bf16.msra.mxu0 0
    %716 = vmatprep.subr.bf16.mxu0 0
    %717 = vmatpush2.bf16.msra.mxu0 0
    %718 = vmatprep.subr.bf16.mxu0 0
    %719 = vmatpush2.bf16.msra.mxu0 0
    %720 = vmatprep.subr.bf16.mxu0 0
    %721 = vmatpush2.bf16.msra.mxu0 0
    %722 = vmatprep.subr.bf16.mxu0 0
    %723 = vmatpush2.bf16.msra.mxu0 0
    %724 = vmatprep.subr.bf16.mxu0 0
    %725 = vmatpush2.bf16.msra.mxu0 0
    %726 = vmatprep.subr.bf16.mxu0 0
    %727 = vmatpush2.bf16.msra.mxu0 0
    %728 = vmatprep.mubr.bf16.mxu0 0
    %729 = vmatmul.mubr.bf16.gmra.mxu0 %v71
    %v730 = vpop.f32.mrf.mxu0
    %v731 = vadd.f32 %v690, %v730
    %v732 = vpop.f32.mrf.mxu0
    %v733 = vpop.f32.mrf.mxu0
    %v734 = vadd.f32 %v693, %v733
    %v735 = vpop.f32.mrf.mxu0
    %736 = vdwg.mxu0
    %v737 = vmax.f32 %v647, 0.0
    %v738 = vmax.f32 %v649, 0.0
    %v739 = vmax.f32 %v731, 0.0
    %v740 = vmax.f32 %v651, 0.0
    %v741 = vmax.f32 %v653, 0.0
    %v742 = vmax.f32 %v734, 0.0
    %v743 = vpack.c.bf16 %v740, %v737
    %v744 = vpack.c.bf16 %v741, %v738
    %v745 = vpack.c.bf16 %v742, %v739
    %v746 = vld [vmem:[#allocation7] sm:$0xff]
    %v747 = vld [vmem:[#allocation7 + $0x8] sm:$0xf]
    %v748 = vld [vmem:[#allocation7 + $0xc] sm:$0xff]
    %v749 = vld [vmem:[#allocation7 + $0x14] sm:$0xf]
    %v750 = vld [vmem:[#allocation7 + $0x18] sm:$0xff]
    %v751 = vld [vmem:[#allocation7 + $0x20] sm:$0xf]
    %v752 = vld [vmem:[#allocation7 + $0x24] sm:$0xff]
    %v753 = vld [vmem:[#allocation7 + $0x2c] sm:$0xf]
    %v754 = vld [vmem:[#allocation7 + $0x30] sm:$0xff]
    %v755 = vld [vmem:[#allocation7 + $0x38] sm:$0xf]
    %v756 = vld [vmem:[#allocation7 + $0x3c] sm:$0xff]
    %v757 = vld [vmem:[#allocation7 + $0x44] sm:$0xf]
    %v758 = vld [vmem:[#allocation7 + $0x48] sm:$0xff]
    %v759 = vld [vmem:[#allocation7 + $0x50] sm:$0xf]
    %v760 = vld [vmem:[#allocation7 + $0x54] sm:$0xff]
    %v761 = vld [vmem:[#allocation7 + $0x5c] sm:$0xf]
    %v762 = vld [vmem:[#allocation7 + $0x60] sm:$0xff]
    %v763 = vld [vmem:[#allocation7 + $0x68] sm:$0xf]
    %v764 = vld [vmem:[#allocation7 + $0x6c] sm:$0xff]
    %v765 = vld [vmem:[#allocation7 + $0x74] sm:$0xf]
    %v766 = vld [vmem:[#allocation7 + $0x78] sm:$0xff]
    %v767 = vld [vmem:[#allocation7 + $0x80] sm:$0xf]
    %v768 = vld [vmem:[#allocation7 + $0x84] sm:$0xff]
    %v769 = vld [vmem:[#allocation7 + $0x8c] sm:$0xf]
    %v770 = vld [vmem:[#allocation7 + $0x90] sm:$0xff]
    %v771 = vld [vmem:[#allocation7 + $0x98] sm:$0xf]
    %v772 = vld [vmem:[#allocation7 + $0x9c] sm:$0xff]
    %v773 = vld [vmem:[#allocation7 + $0xa4] sm:$0xf]
    %v774 = vld [vmem:[#allocation7 + $0xa8] sm:$0xff]
    %v775 = vld [vmem:[#allocation7 + $0xb0] sm:$0xf]
    %v776 = vld [vmem:[#allocation7 + $0xb4] sm:$0xff]
    %v777 = vld [vmem:[#allocation7 + $0xbc] sm:$0xf]
    %v778 = vld [vmem:[#allocation7 + $0xc0] sm:$0xff]
    %v779 = vld [vmem:[#allocation7 + $0xc8] sm:$0xf]
    %v780 = vld [vmem:[#allocation7 + $0xcc] sm:$0xff]
    %v781 = vld [vmem:[#allocation7 + $0xd4] sm:$0xf]
    %v782 = vld [vmem:[#allocation7 + $0xd8] sm:$0xff]
    %v783 = vld [vmem:[#allocation7 + $0xe0] sm:$0xf]
    %v784 = vld [vmem:[#allocation7 + $0xe4] sm:$0xff]
    %v785 = vld [vmem:[#allocation7 + $0xec] sm:$0xf]
    %v786 = vld [vmem:[#allocation7 + $0xf0] sm:$0xff]
    %v787 = vld [vmem:[#allocation7 + $0xf8] sm:$0xf]
    %v788 = vld [vmem:[#allocation7 + $0xfc] sm:$0xff]
    %v789 = vld [vmem:[#allocation7 + $0x104] sm:$0xf]
    %v790 = vld [vmem:[#allocation7 + $0x108] sm:$0xff]
    %v791 = vld [vmem:[#allocation7 + $0x110] sm:$0xf]
    %v792 = vld [vmem:[#allocation7 + $0x114] sm:$0xff]
    %v793 = vld [vmem:[#allocation7 + $0x11c] sm:$0xf]
    %v794 = vld [vmem:[#allocation7 + $0x120] sm:$0xff]
    %v795 = vld [vmem:[#allocation7 + $0x128] sm:$0xf]
    %v796 = vld [vmem:[#allocation7 + $0x12c] sm:$0xff]
    %v797 = vld [vmem:[#allocation7 + $0x134] sm:$0xf]
    %v798 = vld [vmem:[#allocation7 + $0x138] sm:$0xff]
    %v799 = vld [vmem:[#allocation7 + $0x140] sm:$0xf]
    %v800 = vld [vmem:[#allocation7 + $0x144] sm:$0xff]
    %v801 = vld [vmem:[#allocation7 + $0x14c] sm:$0xf]
    %v802 = vld [vmem:[#allocation7 + $0x150] sm:$0xff]
    %v803 = vld [vmem:[#allocation7 + $0x158] sm:$0xf]
    %v804 = vld [vmem:[#allocation7 + $0x15c] sm:$0xff]
    %v805 = vld [vmem:[#allocation7 + $0x164] sm:$0xf]
    %v806 = vld [vmem:[#allocation7 + $0x168] sm:$0xff]
    %v807 = vld [vmem:[#allocation7 + $0x170] sm:$0xf]
    %v808 = vld [vmem:[#allocation7 + $0x174] sm:$0xff]
    %v809 = vld [vmem:[#allocation7 + $0x17c] sm:$0xf]
    %v810 = vld [vmem:[#allocation7 + $0x180] sm:$0xff]
    %v811 = vld [vmem:[#allocation7 + $0x188] sm:$0xf]
    %v812 = vld [vmem:[#allocation7 + $0x18c] sm:$0xff]
    %v813 = vld [vmem:[#allocation7 + $0x194] sm:$0xf]
    %v814 = vld [vmem:[#allocation7 + $0x198] sm:$0xff]
    %v815 = vld [vmem:[#allocation7 + $0x1a0] sm:$0xf]
    %v816 = vld [vmem:[#allocation7 + $0x1a4] sm:$0xff]
    %v817 = vld [vmem:[#allocation7 + $0x1ac] sm:$0xf]
    %v818 = vld [vmem:[#allocation7 + $0x1b0] sm:$0xff]
    %v819 = vld [vmem:[#allocation7 + $0x1b8] sm:$0xf]
    %v820 = vld [vmem:[#allocation7 + $0x1bc] sm:$0xff]
    %v821 = vld [vmem:[#allocation7 + $0x1c4] sm:$0xf]
    %v822 = vld [vmem:[#allocation7 + $0x1c8] sm:$0xff]
    %v823 = vld [vmem:[#allocation7 + $0x1d0] sm:$0xf]
    %v824 = vld [vmem:[#allocation7 + $0x1d4] sm:$0xff]
    %v825 = vld [vmem:[#allocation7 + $0x1dc] sm:$0xf]
    %v826 = vld [vmem:[#allocation7 + $0x1e0] sm:$0xff]
    %v827 = vld [vmem:[#allocation7 + $0x1e8] sm:$0xf]
    %v828 = vld [vmem:[#allocation7 + $0x1ec] sm:$0xff]
    %v829 = vld [vmem:[#allocation7 + $0x1f4] sm:$0xf]
    %v830 = vld [vmem:[#allocation7 + $0x1f8] sm:$0xff]
    %v831 = vld [vmem:[#allocation7 + $0x200] sm:$0xf]
    %v832 = vld [vmem:[#allocation7 + $0x204] sm:$0xff]
    %v833 = vld [vmem:[#allocation7 + $0x20c] sm:$0xf]
    %v834 = vld [vmem:[#allocation7 + $0x210] sm:$0xff]
    %v835 = vld [vmem:[#allocation7 + $0x218] sm:$0xf]
    %v836 = vld [vmem:[#allocation7 + $0x21c] sm:$0xff]
    %v837 = vld [vmem:[#allocation7 + $0x224] sm:$0xf]
    %v838 = vld [vmem:[#allocation7 + $0x228] sm:$0xff]
    %v839 = vld [vmem:[#allocation7 + $0x230] sm:$0xf]
    %v840 = vld [vmem:[#allocation7 + $0x234] sm:$0xff]
    %v841 = vld [vmem:[#allocation7 + $0x23c] sm:$0xf]
    %v842 = vld [vmem:[%s4] sm:$0x7]
    %v844 = vlaneseq
    %v845 = vshrl.u32 %v844, 7
    %v846 = vsub.s32 0, %v845
    %v847 = vrot.slane %v842, %v846
    %v848 = vlaneseq
    %v849 = vshrl.u32 %v848, 7
    %v850 = vsub.s32 1, %v849
    %v851 = vrot.slane %v842, %v850
    %v852 = vlaneseq
    %v853 = vshrl.u32 %v852, 7
    %v854 = vsub.s32 2, %v853
    %v855 = vrot.slane %v842, %v854
    %v955 = vunpack.c.l.b16 %v746
    %v956 = vunpack.c.h.b16 %v746
    %v957 = vunpack.c.l.b16 %v747
    %v958 = vunpack.c.l.b16 %v748
    %v959 = vunpack.c.h.b16 %v748
    %v960 = vunpack.c.l.b16 %v749
    %v961 = vunpack.c.l.b16 %v750
    %v962 = vunpack.c.h.b16 %v750
    %v963 = vunpack.c.l.b16 %v751
    %v964 = vunpack.c.l.b16 %v752
    %v965 = vunpack.c.h.b16 %v752
    %v966 = vunpack.c.l.b16 %v753
    %v967 = vunpack.c.l.b16 %v754
    %v968 = vunpack.c.h.b16 %v754
    %v969 = vunpack.c.l.b16 %v755
    %v970 = vunpack.c.l.b16 %v756
    %v971 = vunpack.c.h.b16 %v756
    %v972 = vunpack.c.l.b16 %v757
    %v973 = vunpack.c.l.b16 %v758
    %v974 = vunpack.c.h.b16 %v758
    %v975 = vunpack.c.l.b16 %v759
    %v976 = vunpack.c.l.b16 %v760
    %v977 = vunpack.c.h.b16 %v760
    %v978 = vunpack.c.l.b16 %v761
    %v979 = vunpack.c.l.b16 %v762
    %v980 = vunpack.c.h.b16 %v762
    %v981 = vunpack.c.l.b16 %v763
    %v982 = vunpack.c.l.b16 %v764
    %v983 = vunpack.c.h.b16 %v764
    %v984 = vunpack.c.l.b16 %v765
    %v985 = vunpack.c.l.b16 %v766
    %v986 = vunpack.c.h.b16 %v766
    %v987 = vunpack.c.l.b16 %v767
    %v988 = vunpack.c.l.b16 %v768
    %v989 = vunpack.c.h.b16 %v768
    %v990 = vunpack.c.l.b16 %v769
    %v991 = vunpack.c.l.b16 %v770
    %v992 = vunpack.c.h.b16 %v770
    %v993 = vunpack.c.l.b16 %v771
    %v994 = vunpack.c.l.b16 %v772
    %v995 = vunpack.c.h.b16 %v772
    %v996 = vunpack.c.l.b16 %v773
    %v997 = vunpack.c.l.b16 %v774
    %v998 = vunpack.c.h.b16 %v774
    %v999 = vunpack.c.l.b16 %v775
    %v1000 = vunpack.c.l.b16 %v776
    %v1001 = vunpack.c.h.b16 %v776
    %v1002 = vunpack.c.l.b16 %v777
    %v1003 = vunpack.c.l.b16 %v778
    %v1004 = vunpack.c.h.b16 %v778
    %v1005 = vunpack.c.l.b16 %v779
    %v1006 = vunpack.c.l.b16 %v780
    %v1007 = vunpack.c.h.b16 %v780
    %v1008 = vunpack.c.l.b16 %v781
    %v1009 = vunpack.c.l.b16 %v782
    %v1010 = vunpack.c.h.b16 %v782
    %v1011 = vunpack.c.l.b16 %v783
    %v1012 = vunpack.c.l.b16 %v784
    %v1013 = vunpack.c.h.b16 %v784
    %v1014 = vunpack.c.l.b16 %v785
    %v1015 = vunpack.c.l.b16 %v786
    %v1016 = vunpack.c.h.b16 %v786
    %v1017 = vunpack.c.l.b16 %v787
    %v1018 = vunpack.c.l.b16 %v788
    %v1019 = vunpack.c.h.b16 %v788
    %v1020 = vunpack.c.l.b16 %v789
    %v1021 = vunpack.c.l.b16 %v790
    %v1022 = vunpack.c.h.b16 %v790
    %v1023 = vunpack.c.l.b16 %v791
    %v1024 = vunpack.c.l.b16 %v792
    %v1025 = vunpack.c.h.b16 %v792
    %v1026 = vunpack.c.l.b16 %v793
    %v1027 = vunpack.c.l.b16 %v794
    %v1028 = vunpack.c.h.b16 %v794
    %v1029 = vunpack.c.l.b16 %v795
    %v1030 = vunpack.c.l.b16 %v796
    %v1031 = vunpack.c.h.b16 %v796
    %v1032 = vunpack.c.l.b16 %v797
    %v1033 = vunpack.c.l.b16 %v798
    %v1034 = vunpack.c.h.b16 %v798
    %v1035 = vunpack.c.l.b16 %v799
    %v1036 = vunpack.c.l.b16 %v800
    %v1037 = vunpack.c.h.b16 %v800
    %v1038 = vunpack.c.l.b16 %v801
    %v1039 = vunpack.c.l.b16 %v802
    %v1040 = vunpack.c.h.b16 %v802
    %v1041 = vunpack.c.l.b16 %v803
    %v1042 = vunpack.c.l.b16 %v804
    %v1043 = vunpack.c.h.b16 %v804
    %v1044 = vunpack.c.l.b16 %v805
    %v1045 = vunpack.c.l.b16 %v806
    %v1046 = vunpack.c.h.b16 %v806
    %v1047 = vunpack.c.l.b16 %v807
    %v1048 = vunpack.c.l.b16 %v808
    %v1049 = vunpack.c.h.b16 %v808
    %v1050 = vunpack.c.l.b16 %v809
    %v1051 = vunpack.c.l.b16 %v810
    %v1052 = vunpack.c.h.b16 %v810
    %v1053 = vunpack.c.l.b16 %v811
    %v1054 = vunpack.c.l.b16 %v812
    %v1055 = vunpack.c.h.b16 %v812
    %v1056 = vunpack.c.l.b16 %v813
    %v1057 = vunpack.c.l.b16 %v814
    %v1058 = vunpack.c.h.b16 %v814
    %v1059 = vunpack.c.l.b16 %v815
    %v1060 = vunpack.c.l.b16 %v816
    %v1061 = vunpack.c.h.b16 %v816
    %v1062 = vunpack.c.l.b16 %v817
    %v1063 = vunpack.c.l.b16 %v818
    %v1064 = vunpack.c.h.b16 %v818
    %v1065 = vunpack.c.l.b16 %v819
    %v1066 = vunpack.c.l.b16 %v820
    %v1067 = vunpack.c.h.b16 %v820
    %v1068 = vunpack.c.l.b16 %v821
    %v1069 = vunpack.c.l.b16 %v822
    %v1070 = vunpack.c.h.b16 %v822
    %v1071 = vunpack.c.l.b16 %v823
    %v1072 = vunpack.c.l.b16 %v824
    %v1073 = vunpack.c.h.b16 %v824
    %v1074 = vunpack.c.l.b16 %v825
    %v1075 = vunpack.c.l.b16 %v826
    %v1076 = vunpack.c.h.b16 %v826
    %v1077 = vunpack.c.l.b16 %v827
    %v1078 = vunpack.c.l.b16 %v828
    %v1079 = vunpack.c.h.b16 %v828
    %v1080 = vunpack.c.l.b16 %v829
    %v1081 = vunpack.c.l.b16 %v830
    %v1082 = vunpack.c.h.b16 %v830
    %v1083 = vunpack.c.l.b16 %v831
    %v1084 = vunpack.c.l.b16 %v832
    %v1085 = vunpack.c.h.b16 %v832
    %v1086 = vunpack.c.l.b16 %v833
    %v1087 = vunpack.c.l.b16 %v834
    %v1088 = vunpack.c.h.b16 %v834
    %v1089 = vunpack.c.l.b16 %v835
    %v1090 = vunpack.c.l.b16 %v836
    %v1091 = vunpack.c.h.b16 %v836
    %v1092 = vunpack.c.l.b16 %v837
    %v1093 = vunpack.c.l.b16 %v838
    %v1094 = vunpack.c.h.b16 %v838
    %v1095 = vunpack.c.l.b16 %v839
    %v1096 = vunpack.c.l.b16 %v840
    %v1097 = vunpack.c.h.b16 %v840
    %v1098 = vunpack.c.l.b16 %v841
    %v1099 = vpack.c.b16 %v958, %v955
    %v1100 = vpack.c.b16 %v959, %v956
    %v1101 = vpack.c.b16 %v960, %v957
    %v1102 = vpack.c.b16 %v964, %v961
    %v1103 = vpack.c.b16 %v965, %v962
    %v1104 = vpack.c.b16 %v966, %v963
    %v1105 = vpack.c.b16 %v970, %v967
    %v1106 = vpack.c.b16 %v971, %v968
    %v1107 = vpack.c.b16 %v972, %v969
    %v1108 = vpack.c.b16 %v976, %v973
    %v1109 = vpack.c.b16 %v977, %v974
    %v1110 = vpack.c.b16 %v978, %v975
    %v1111 = vpack.c.b16 %v982, %v979
    %v1112 = vpack.c.b16 %v983, %v980
    %v1113 = vpack.c.b16 %v984, %v981
    %v1114 = vpack.c.b16 %v988, %v985
    %v1115 = vpack.c.b16 %v989, %v986
    %v1116 = vpack.c.b16 %v990, %v987
    %v1117 = vpack.c.b16 %v994, %v991
    %v1118 = vpack.c.b16 %v995, %v992
    %v1119 = vpack.c.b16 %v996, %v993
    %v1120 = vpack.c.b16 %v1000, %v997
    %v1121 = vpack.c.b16 %v1001, %v998
    %v1122 = vpack.c.b16 %v1002, %v999
    %v1123 = vpack.c.b16 %v1006, %v1003
    %v1124 = vpack.c.b16 %v1007, %v1004
    %v1125 = vpack.c.b16 %v1008, %v1005
    %v1126 = vpack.c.b16 %v1012, %v1009
    %v1127 = vpack.c.b16 %v1013, %v1010
    %v1128 = vpack.c.b16 %v1014, %v1011
    %v1129 = vpack.c.b16 %v1018, %v1015
    %v1130 = vpack.c.b16 %v1019, %v1016
    %v1131 = vpack.c.b16 %v1020, %v1017
    %v1132 = vpack.c.b16 %v1024, %v1021
    %v1133 = vpack.c.b16 %v1025, %v1022
    %v1134 = vpack.c.b16 %v1026, %v1023
    %v1135 = vpack.c.b16 %v1030, %v1027
    %v1136 = vpack.c.b16 %v1031, %v1028
    %v1137 = vpack.c.b16 %v1032, %v1029
    %v1138 = vpack.c.b16 %v1036, %v1033
    %v1139 = vpack.c.b16 %v1037, %v1034
    %v1140 = vpack.c.b16 %v1038, %v1035
    %v1141 = vpack.c.b16 %v1042, %v1039
    %v1142 = vpack.c.b16 %v1043, %v1040
    %v1143 = vpack.c.b16 %v1044, %v1041
    %v1144 = vpack.c.b16 %v1048, %v1045
    %v1145 = vpack.c.b16 %v1049, %v1046
    %v1146 = vpack.c.b16 %v1050, %v1047
    %v1147 = vpack.c.b16 %v1054, %v1051
    %v1148 = vpack.c.b16 %v1055, %v1052
    %v1149 = vpack.c.b16 %v1056, %v1053
    %v1150 = vpack.c.b16 %v1060, %v1057
    %v1151 = vpack.c.b16 %v1061, %v1058
    %v1152 = vpack.c.b16 %v1062, %v1059
    %v1153 = vpack.c.b16 %v1066, %v1063
    %v1154 = vpack.c.b16 %v1067, %v1064
    %v1155 = vpack.c.b16 %v1068, %v1065
    %v1156 = vpack.c.b16 %v1072, %v1069
    %v1157 = vpack.c.b16 %v1073, %v1070
    %v1158 = vpack.c.b16 %v1074, %v1071
    %v1159 = vpack.c.b16 %v1078, %v1075
    %v1160 = vpack.c.b16 %v1079, %v1076
    %v1161 = vpack.c.b16 %v1080, %v1077
    %v1162 = vpack.c.b16 %v1084, %v1081
    %v1163 = vpack.c.b16 %v1085, %v1082
    %v1164 = vpack.c.b16 %v1086, %v1083
    %v1165 = vpack.c.b16 %v1090, %v1087
    %v1166 = vpack.c.b16 %v1091, %v1088
    %v1167 = vpack.c.b16 %v1092, %v1089
    %v1168 = vpack.c.b16 %v1096, %v1093
    %v1169 = vpack.c.b16 %v1097, %v1094
    %v1170 = vpack.c.b16 %v1098, %v1095
    %1243 = vmatprep.subr.bf16.mxu0 %v1121
    %1244 = vmatpush1.bf16.msra.mxu0 %v1120
    %1245 = vmatprep.subr.bf16.mxu0 %v1118
    %1246 = vmatpush1.bf16.msra.mxu0 %v1117
    %1247 = vmatprep.subr.bf16.mxu0 %v1115
    %1248 = vmatpush1.bf16.msra.mxu0 %v1114
    %1249 = vmatprep.subr.bf16.mxu0 %v1112
    %1250 = vmatpush1.bf16.msra.mxu0 %v1111
    %1251 = vmatprep.subr.bf16.mxu0 %v1109
    %1252 = vmatpush1.bf16.msra.mxu0 %v1108
    %1253 = vmatprep.subr.bf16.mxu0 %v1106
    %1254 = vmatpush1.bf16.msra.mxu0 %v1105
    %1255 = vmatprep.subr.bf16.mxu0 %v1103
    %1256 = vmatpush1.bf16.msra.mxu0 %v1102
    %1257 = vmatprep.subr.bf16.mxu0 %v1100
    %1258 = vmatpush1.bf16.msra.mxu0 %v1099
    %1259 = vmatprep.subr.bf16.mxu0 %v1145
    %1260 = vmatpush2.bf16.msra.mxu0 %v1144
    %1261 = vmatprep.subr.bf16.mxu0 %v1142
    %1262 = vmatpush2.bf16.msra.mxu0 %v1141
    %1263 = vmatprep.subr.bf16.mxu0 %v1139
    %1264 = vmatpush2.bf16.msra.mxu0 %v1138
    %1265 = vmatprep.subr.bf16.mxu0 %v1136
    %1266 = vmatpush2.bf16.msra.mxu0 %v1135
    %1267 = vmatprep.subr.bf16.mxu0 %v1133
    %1268 = vmatpush2.bf16.msra.mxu0 %v1132
    %1269 = vmatprep.subr.bf16.mxu0 %v1130
    %1270 = vmatpush2.bf16.msra.mxu0 %v1129
    %1271 = vmatprep.subr.bf16.mxu0 %v1127
    %1272 = vmatpush2.bf16.msra.mxu0 %v1126
    %1273 = vmatprep.subr.bf16.mxu0 %v1124
    %1274 = vmatpush2.bf16.msra.mxu0 %v1123
    %1275 = vmatprep.mubr.bf16.mxu0 %v744
    %1276 = vmatmul.mubr.bf16.gmra.mxu0 %v743
    %v1277 = vpop.f32.mrf.mxu0
    %v1278 = vadd.f32 %v847, %v1277
    %v1279 = vpop.f32.mrf.mxu0
    %v1280 = vadd.f32 %v851, %v1279
    %v1281 = vpop.f32.mrf.mxu0
    %v1282 = vadd.f32 %v847, %v1281
    %v1283 = vpop.f32.mrf.mxu0
    %v1284 = vadd.f32 %v851, %v1283
    %1285 = vdwg.mxu0
    %1286 = vmatprep.subr.bf16.mxu0 %v1169
    %1287 = vmatpush1.bf16.msra.mxu0 %v1168
    %1288 = vmatprep.subr.bf16.mxu0 %v1166
    %1289 = vmatpush1.bf16.msra.mxu0 %v1165
    %1290 = vmatprep.subr.bf16.mxu0 %v1163
    %1291 = vmatpush1.bf16.msra.mxu0 %v1162
    %1292 = vmatprep.subr.bf16.mxu0 %v1160
    %1293 = vmatpush1.bf16.msra.mxu0 %v1159
    %1294 = vmatprep.subr.bf16.mxu0 %v1157
    %1295 = vmatpush1.bf16.msra.mxu0 %v1156
    %1296 = vmatprep.subr.bf16.mxu0 %v1154
    %1297 = vmatpush1.bf16.msra.mxu0 %v1153
    %1298 = vmatprep.subr.bf16.mxu0 %v1151
    %1299 = vmatpush1.bf16.msra.mxu0 %v1150
    %1300 = vmatprep.subr.bf16.mxu0 %v1148
    %1301 = vmatpush1.bf16.msra.mxu0 %v1147
    %1302 = vmatprep.subr.bf16.mxu0 0
    %1303 = vmatpush2.bf16.msra.mxu0 0
    %1304 = vmatprep.subr.bf16.mxu0 0
    %1305 = vmatpush2.bf16.msra.mxu0 0
    %1306 = vmatprep.subr.bf16.mxu0 0
    %1307 = vmatpush2.bf16.msra.mxu0 0
    %1308 = vmatprep.subr.bf16.mxu0 0
    %1309 = vmatpush2.bf16.msra.mxu0 0
    %1310 = vmatprep.subr.bf16.mxu0 0
    %1311 = vmatpush2.bf16.msra.mxu0 0
    %1312 = vmatprep.subr.bf16.mxu0 0
    %1313 = vmatpush2.bf16.msra.mxu0 0
    %1314 = vmatprep.subr.bf16.mxu0 0
    %1315 = vmatpush2.bf16.msra.mxu0 0
    %1316 = vmatprep.subr.bf16.mxu0 0
    %1317 = vmatpush2.bf16.msra.mxu0 0
    %1318 = vmatprep.mubr.bf16.mxu0 0
    %1319 = vmatmul.mubr.bf16.gmra.mxu0 %v745
    %v1320 = vpop.f32.mrf.mxu0
    %v1321 = vadd.f32 %v1278, %v1320
    %v1322 = vpop.f32.mrf.mxu0
    %v1323 = vadd.f32 %v1280, %v1322
    %v1324 = vpop.f32.mrf.mxu0
    %v1325 = vadd.f32 %v1282, %v1324
    %v1326 = vpop.f32.mrf.mxu0
    %v1327 = vadd.f32 %v1284, %v1326
    %1328 = vdwg.mxu0
    %1329 = vmatprep.subr.bf16.mxu0 0
    %1330 = vmatpush1.bf16.msra.mxu0 %v1122
    %1331 = vmatprep.subr.bf16.mxu0 0
    %1332 = vmatpush1.bf16.msra.mxu0 %v1119
    %1333 = vmatprep.subr.bf16.mxu0 0
    %1334 = vmatpush1.bf16.msra.mxu0 %v1116
    %1335 = vmatprep.subr.bf16.mxu0 0
    %1336 = vmatpush1.bf16.msra.mxu0 %v1113
    %1337 = vmatprep.subr.bf16.mxu0 0
    %1338 = vmatpush1.bf16.msra.mxu0 %v1110
    %1339 = vmatprep.subr.bf16.mxu0 0
    %1340 = vmatpush1.bf16.msra.mxu0 %v1107
    %1341 = vmatprep.subr.bf16.mxu0 0
    %1342 = vmatpush1.bf16.msra.mxu0 %v1104
    %1343 = vmatprep.subr.bf16.mxu0 0
    %1344 = vmatpush1.bf16.msra.mxu0 %v1101
    %1345 = vmatprep.subr.bf16.mxu0 0
    %1346 = vmatpush2.bf16.msra.mxu0 %v1146
    %1347 = vmatprep.subr.bf16.mxu0 0
    %1348 = vmatpush2.bf16.msra.mxu0 %v1143
    %1349 = vmatprep.subr.bf16.mxu0 0
    %1350 = vmatpush2.bf16.msra.mxu0 %v1140
    %1351 = vmatprep.subr.bf16.mxu0 0
    %1352 = vmatpush2.bf16.msra.mxu0 %v1137
    %1353 = vmatprep.subr.bf16.mxu0 0
    %1354 = vmatpush2.bf16.msra.mxu0 %v1134
    %1355 = vmatprep.subr.bf16.mxu0 0
    %1356 = vmatpush2.bf16.msra.mxu0 %v1131
    %1357 = vmatprep.subr.bf16.mxu0 0
    %1358 = vmatpush2.bf16.msra.mxu0 %v1128
    %1359 = vmatprep.subr.bf16.mxu0 0
    %1360 = vmatpush2.bf16.msra.mxu0 %v1125
    %1361 = vmatprep.mubr.bf16.mxu0 %v744
    %1362 = vmatmul.mubr.bf16.gmra.mxu0 %v743
    %v1363 = vpop.f32.mrf.mxu0
    %v1364 = vadd.f32 %v855, %v1363
    %v1365 = vpop.f32.mrf.mxu0
    %v1366 = vpop.f32.mrf.mxu0
    %v1367 = vadd.f32 %v855, %v1366
    %v1368 = vpop.f32.mrf.mxu0
    %1369 = vdwg.mxu0
    %1370 = vmatprep.subr.bf16.mxu0 0
    %1371 = vmatpush1.bf16.msra.mxu0 %v1170
    %1372 = vmatprep.subr.bf16.mxu0 0
    %1373 = vmatpush1.bf16.msra.mxu0 %v1167
    %1374 = vmatprep.subr.bf16.mxu0 0
    %1375 = vmatpush1.bf16.msra.mxu0 %v1164
    %1376 = vmatprep.subr.bf16.mxu0 0
    %1377 = vmatpush1.bf16.msra.mxu0 %v1161
    %1378 = vmatprep.subr.bf16.mxu0 0
    %1379 = vmatpush1.bf16.msra.mxu0 %v1158
    %1380 = vmatprep.subr.bf16.mxu0 0
    %1381 = vmatpush1.bf16.msra.mxu0 %v1155
    %1382 = vmatprep.subr.bf16.mxu0 0
    %1383 = vmatpush1.bf16.msra.mxu0 %v1152
    %1384 = vmatprep.subr.bf16.mxu0 0
    %1385 = vmatpush1.bf16.msra.mxu0 %v1149
    %1386 = vmatprep.subr.bf16.mxu0 0
    %1387 = vmatpush2.bf16.msra.mxu0 0
    %1388 = vmatprep.subr.bf16.mxu0 0
    %1389 = vmatpush2.bf16.msra.mxu0 0
    %1390 = vmatprep.subr.bf16.mxu0 0
    %1391 = vmatpush2.bf16.msra.mxu0 0
    %1392 = vmatprep.subr.bf16.mxu0 0
    %1393 = vmatpush2.bf16.msra.mxu0 0
    %1394 = vmatprep.subr.bf16.mxu0 0
    %1395 = vmatpush2.bf16.msra.mxu0 0
    %1396 = vmatprep.subr.bf16.mxu0 0
    %1397 = vmatpush2.bf16.msra.mxu0 0
    %1398 = vmatprep.subr.bf16.mxu0 0
    %1399 = vmatpush2.bf16.msra.mxu0 0
    %1400 = vmatprep.subr.bf16.mxu0 0
    %1401 = vmatpush2.bf16.msra.mxu0 0
    %1402 = vmatprep.mubr.bf16.mxu0 0
    %1403 = vmatmul.mubr.bf16.gmra.mxu0 %v745
    %v1404 = vpop.f32.mrf.mxu0
    %v1405 = vadd.f32 %v1364, %v1404
    %v1406 = vpop.f32.mrf.mxu0
    %v1407 = vpop.f32.mrf.mxu0
    %v1408 = vadd.f32 %v1367, %v1407
    %v1409 = vpop.f32.mrf.mxu0
    %1410 = vdwg.mxu0
    %1411 = vst [vmem:[#allocation8] sm:$0xff] %v1321
    %1412 = vst [vmem:[#allocation8 + $0x8] sm:$0xff] %v1323
    %1413 = vst [vmem:[#allocation8 + $0x10] sm:$0xff] %v1405
    %1414 = vst [vmem:[#allocation8 + $0x18] sm:$0xff] %v1325
    %1415 = vst [vmem:[#allocation8 + $0x20] sm:$0xff] %v1327
    %1416 = vst [vmem:[#allocation8 + $0x28] sm:$0xff] %v1408
    // Predicated region
    $region34: #{tpu_custom_call.1} parent=1 // pred_check
      _
    $region35: #{tpu_custom_call.1} parent=1 // pred_check_branch
      %1418 = sbr.rel (0) target = $region37
    $region36: #{tpu_custom_call.1} parent=1 // pred_region
      %s1420 = ssub.s32 768, 768
      %1421 = vsyncadd [#allocation4], %s1420
      %s1422 = sshll.u32 [#allocation8], 4
      %s1423 = int_to_ptr.vmem [resolvable:$true] %s1422
      %1428 = dma.vmem_to_hbm [thread:$0]  %s1423, 768, %s5, [#allocation4], 384, 384, 24
    $region37: #{tpu_custom_call.1} parent=1 // pred_fallthru
      _
    // Predicated region
    $region38: #{tpu_custom_call.1} parent=1 // pred_check
      _
    $region39: #{tpu_custom_call.1} parent=1 // pred_check_branch
      %1430 = sbr.rel (0) target = $region41
    $region40: #{tpu_custom_call.1} parent=1 // pred_region
      %1431 = dma.done [#allocation4], 768
    $region41: #{tpu_custom_call.1} parent=1 // pred_fallthru
      _
    %1432 = vsyncpa [#allocation3], 1
    %1433 = vsyncpa [#allocation6], 1
    %1434 = vsyncpa [#allocation4], 1

</llo_original>
